<compile_context>
chip_gen: v7x
topology: tpu7x:2x2x1
jax: 0.10.0
libtpu: 0.0.40
codegen_flags: <defaults>
</compile_context>

<pallas_src>
import jax
import jax.numpy as jnp
import numpy as np
from jax.experimental import pallas as pl
from jax.experimental.pallas import tpu as pltpu


def _round_up(x, m):
    return ((x + m - 1) // m) * m


def _make_kernel(layer_meta, bias_row, use_bf16):
    """layer_meta: list of (c_in_i, c_out_i, col_offset_i) into the packed wb buffer."""

    def matmul_bias(x, w, b):
        if use_bf16:
            y = jnp.dot(x.astype(jnp.bfloat16), w.astype(jnp.bfloat16),
                        preferred_element_type=jnp.float32)
        else:
            y = jnp.dot(x, w, preferred_element_type=jnp.float32)
        return y + b

    def kernel(x_ref, wb_ref, sel_ref, pn_ref):
        # x_ref: (P*A, c_in) f32 for the current batch element (rows r = p*A + a).
        x = x_ref[...]

        # Hidden 1x1-conv layers (matmul over channels) + ReLU (all but last).
        for (ci, co, off) in layer_meta[:-1]:
            w = wb_ref[0:ci, off:off + co]                     # (ci, co)
            b = wb_ref[bias_row:bias_row + 1, off:off + co]    # (1, co)
            x = jnp.maximum(matmul_bias(x, w, b), 0.0)

        # Mean over P *before* the final (purely linear) layer — it commutes
        # with the linear map, so the last matmul runs on A rows, not P*A.
        #   sel: (A, P*A), sel[a, p*A+a] = 1/P  ->  m = sel @ x : (A, c_mid)
        m = jnp.dot(sel_ref[...], x, preferred_element_type=jnp.float32)

        ci, co, off = layer_meta[-1]
        w = wb_ref[0:ci, off:off + co]
        b = wb_ref[bias_row:bias_row + 1, off:off + co]
        m = matmul_bias(m, w, b)                               # (A, c_out)

        # L2-normalize over the flattened (c_out*A) vector (pure-f32 epilogue,
        # matches F.normalize(p=2, eps=1e-12)).
        sq = jnp.sum(m * m, axis=1, keepdims=True)             # (A, 1)
        nrm = jnp.sqrt(jnp.sum(sq, axis=0, keepdims=True))     # (1, 1)
        pn_ref[...] = m / jnp.maximum(nrm, 1e-12)              # (A, c_out)

    return kernel


def equi_out_block(feats_nchw, weights, biases, *, use_bf16_matmul=False):
    """feats_nchw: (nb, c_in, P, A) float32, like the PyTorch module.

    weights[i]: (c_in_i, c_out_i)   (transposed 1x1 Conv2d weight)
    biases[i]:  (c_out_i,)
    Returns (points_norm (nb, c_out, A), inv_feat (nb, c_out)).
    """
    nb, c_in, P, A = feats_nchw.shape
    n_layers = len(weights)
    c_out = int(weights[-1].shape[1])

    # NCHW -> channels-last; fold P into the matmul M dim in the wrapper
    # (fuses with the layout transpose; no in-kernel reshape).
    x = jnp.transpose(feats_nchw, (0, 2, 3, 1)).astype(jnp.float32)
    x = x.reshape(nb, P * A, c_in)                               # rows r = p*A + a

    # Pack all weights + biases into ONE resident VMEM buffer, tile-aligned:
    #   rows [0:c_in_i]  cols [off_i:off_i+c_out_i]  = W_i   (off_i % 128 == 0)
    #   row  bias_row    cols [off_i:off_i+c_out_i]  = b_i   (bias_row % 8 == 0)
    in_dims = [int(w.shape[0]) for w in weights]
    out_dims = [int(w.shape[1]) for w in weights]
    bias_row = _round_up(max(in_dims), 8)
    col_block = max(_round_up(max(out_dims), 128), 128)
    total_rows = _round_up(bias_row + 1, 8)
    total_cols = col_block * n_layers

    wb = jnp.zeros((total_rows, total_cols), jnp.float32)
    layer_meta = []
    for i, (w, b) in enumerate(zip(weights, biases)):
        ci, co = in_dims[i], out_dims[i]
        off = i * col_block
        wb = wb.at[:ci, off:off + co].set(w.astype(jnp.float32))
        wb = wb.at[bias_row, off:off + co].set(b.astype(jnp.float32))
        layer_meta.append((ci, co, off))

    # Constant P-mean selector, built once host-side (static shapes).
    sel_np = np.zeros((A, P * A), np.float32)
    for p in range(P):
        sel_np[np.arange(A), p * A + np.arange(A)] = 1.0 / float(P)
    sel = jnp.asarray(sel_np)

    pn = pl.pallas_call(
        _make_kernel(layer_meta, bias_row, use_bf16_matmul),
        out_shape=jax.ShapeDtypeStruct((nb, A, c_out), jnp.float32),
        grid_spec=pltpu.PrefetchScalarGridSpec(
            num_scalar_prefetch=0,
            grid=(nb,),
            in_specs=[
                pl.BlockSpec((None, P * A, c_in), lambda b: (b, 0, 0)),
                pl.BlockSpec((total_rows, total_cols), lambda b: (0, 0)),
                pl.BlockSpec((A, P * A), lambda b: (0, 0)),
            ],
            out_specs=pl.BlockSpec((None, A, c_out), lambda b: (b, 0, 0)),
        ),
        compiler_params=pltpu.CompilerParams(
            dimension_semantics=("parallel",)),
    )(x, wb, sel)

    # Back to PyTorch convention; inv_feat is a trivial XLA reduction.
    points_norm = jnp.transpose(pn, (0, 2, 1))     # (nb, c_out, A)
    inv_feat = jnp.mean(pn, axis=1)                # mean over A -> (nb, c_out)
    return points_norm, inv_feat


def reference(feats, weights, biases):
    """Pure-JAX replica of the PyTorch forward, for verification."""
    x = feats
    n = len(weights)
    for i, (w, b) in enumerate(zip(weights, biases)):
        x = jnp.einsum('nchw,cd->ndhw', x, w) + b[None, :, None, None]
        if i != n - 1:
            x = jax.nn.relu(x)
    x = x.mean(axis=2)                       # (nb, c_out, A)
    nb, c_out, na = x.shape
    flat = x.reshape(nb, -1)
    nrm = jnp.sqrt(jnp.sum(flat * flat, axis=1, keepdims=True))
    pn = (flat / jnp.maximum(nrm, 1e-12)).reshape(nb, c_out, na)
    inv = pn.mean(axis=2)
    return pn, inv


if __name__ == "__main__":
    nb, c_in, P, A = 2, 4, 16, 8          # feats NCHW = (nb, c_in, P, A)
    mlp = [32, 16]                        # params['mlp']

    key = jax.random.PRNGKey(0)
    keys = jax.random.split(key, 1 + 2 * len(mlp))
    feats = jax.random.normal(keys[0], (nb, c_in, P, A), dtype=jnp.float32)

    # Deterministic Conv2d-style init (uniform(-1/sqrt(fan_in), 1/sqrt(fan_in))).
    weights, biases = [], []
    ci = c_in
    for li, co in enumerate(mlp):
        bound = 1.0 / float(np.sqrt(ci))
        w = jax.random.uniform(keys[1 + 2 * li], (ci, co),
                               minval=-bound, maxval=bound, dtype=jnp.float32)
        b = jax.random.uniform(keys[2 + 2 * li], (co,),
                               minval=-bound, maxval=bound, dtype=jnp.float32)
        weights.append(w)
        biases.append(b)
        ci = co

    # f32 matmul path by default so the 1e-5 check holds; pass
    # use_bf16_matmul=True on v6e/v7x for native-MXU bf16 throughput.
    pn, inv = equi_out_block(feats, weights, biases)
    jax.block_until_ready((pn, inv))

    pn_ref, inv_ref = reference(feats, weights, biases)
    np.testing.assert_allclose(np.asarray(pn), np.asarray(pn_ref), rtol=1e-5, atol=1e-5)
    np.testing.assert_allclose(np.asarray(inv), np.asarray(inv_ref), rtol=1e-5, atol=1e-5)

    print("KERNEL_OK")
</pallas_src>

<mosaic_0001>
module attributes {stable_mosaic.version = 11 : i64} {
  func.func @kernel(%arg0: i32, %arg1: memref<1x128x4xf32, #tpu.memory_space<vmem>>, %arg2: memref<40x256xf32, #tpu.memory_space<vmem>>, %arg3: memref<8x128xf32, #tpu.memory_space<vmem>>, %arg4: memref<1x8x16xf32, #tpu.memory_space<vmem>>) attributes {dimension_semantics = [#tpu.dimension_semantics<parallel>], iteration_bounds = array<i64: 2>, scalar_prefetch = 0 : i64, scratch_operands = 0 : i64, tpu.core_type = #tpu.core_type<tc>, window_params = [{transform_indices = @transform_0, window_bounds = array<i64: 1, 128, 4>}, {pipeline_mode = #tpu.pipeline_mode<synchronous>, transform_indices = @transform_1, window_bounds = array<i64: 40, 256>}, {pipeline_mode = #tpu.pipeline_mode<synchronous>, transform_indices = @transform_2, window_bounds = array<i64: 8, 128>}, {transform_indices = @transform_3, window_bounds = array<i64: 1, 8, 16>}]} {
    %c0 = arith.constant 0 : index
    %c0_0 = arith.constant 0 : index
    %c0_1 = arith.constant 0 : index
    %0 = vector.load %arg1[%c0, %c0_0, %c0_1] : memref<1x128x4xf32, #tpu.memory_space<vmem>>, vector<1x128x4xf32>
    %1 = vector.shape_cast %0 : vector<1x128x4xf32> to vector<128x4xf32>
    %c0_2 = arith.constant 0 : index
    %c0_3 = arith.constant 0 : index
    %2 = vector.load %arg2[%c0_2, %c0_3] : memref<40x256xf32, #tpu.memory_space<vmem>>, vector<4x32xf32>
    %c32 = arith.constant 32 : index
    %c0_4 = arith.constant 0 : index
    %3 = vector.load %arg2[%c32, %c0_4] : memref<40x256xf32, #tpu.memory_space<vmem>>, vector<1x32xf32>
    %cst = arith.constant dense<0.000000e+00> : vector<128x32xf32>
    %4 = tpu.matmul %1, %2, %cst {dimension_numbers = #tpu.dot_dimension_numbers<[1], [0], [0], [1], [0, 0, 1, 1], [], []>} : vector<128x4xf32>, vector<4x32xf32>, vector<128x32xf32> -> vector<128x32xf32>
    %5 = vector.broadcast %3 : vector<1x32xf32> to vector<128x32xf32>
    %6 = arith.addf %4, %5 : vector<128x32xf32>
    %cst_5 = arith.constant 0.000000e+00 : f32
    %7 = vector.broadcast %cst_5 : f32 to vector<128x32xf32>
    %8 = arith.maximumf %6, %7 : vector<128x32xf32>
    %c0_6 = arith.constant 0 : index
    %c0_7 = arith.constant 0 : index
    %9 = vector.load %arg3[%c0_6, %c0_7] : memref<8x128xf32, #tpu.memory_space<vmem>>, vector<8x128xf32>
    %cst_8 = arith.constant dense<0.000000e+00> : vector<8x32xf32>
    %10 = tpu.matmul %9, %8, %cst_8 {dimension_numbers = #tpu.dot_dimension_numbers<[1], [0], [0], [1], [0, 0, 1, 1], [], []>} : vector<8x128xf32>, vector<128x32xf32>, vector<8x32xf32> -> vector<8x32xf32>
    %c0_9 = arith.constant 0 : index
    %c128 = arith.constant 128 : index
    %11 = vector.load %arg2[%c0_9, %c128] : memref<40x256xf32, #tpu.memory_space<vmem>>, vector<32x16xf32>
    %c32_10 = arith.constant 32 : index
    %c128_11 = arith.constant 128 : index
    %12 = vector.load %arg2[%c32_10, %c128_11] : memref<40x256xf32, #tpu.memory_space<vmem>>, vector<1x16xf32>
    %cst_12 = arith.constant dense<0.000000e+00> : vector<8x16xf32>
    %13 = tpu.matmul %10, %11, %cst_12 {dimension_numbers = #tpu.dot_dimension_numbers<[1], [0], [0], [1], [0, 0, 1, 1], [], []>} : vector<8x32xf32>, vector<32x16xf32>, vector<8x16xf32> -> vector<8x16xf32>
    %14 = vector.broadcast %12 : vector<1x16xf32> to vector<8x16xf32>
    %15 = arith.addf %13, %14 : vector<8x16xf32>
    %16 = arith.mulf %15, %15 : vector<8x16xf32>
    %cst_13 = arith.constant dense<0.000000e+00> : vector<8xf32>
    %17 = vector.multi_reduction <add>, %16, %cst_13 [1] : vector<8x16xf32> to vector<8xf32>
    %18 = vector.shape_cast %17 : vector<8xf32> to vector<8x1xf32>
    %cst_14 = arith.constant dense<0.000000e+00> : vector<1xf32>
    %19 = vector.multi_reduction <add>, %18, %cst_14 [0] : vector<8x1xf32> to vector<1xf32>
    %20 = vector.shape_cast %19 : vector<1xf32> to vector<1x1xf32>
    %21 = math.sqrt %20 : vector<1x1xf32>
    %cst_15 = arith.constant 9.99999996E-13 : f32
    %22 = vector.broadcast %cst_15 : f32 to vector<1x1xf32>
    %23 = arith.maximumf %21, %22 : vector<1x1xf32>
    %24 = vector.broadcast %23 : vector<1x1xf32> to vector<8x16xf32>
    %25 = arith.divf %15, %24 : vector<8x16xf32>
    %c0_16 = arith.constant 0 : index
    %c0_17 = arith.constant 0 : index
    %c0_18 = arith.constant 0 : index
    %26 = vector.load %arg4[%c0_16, %c0_17, %c0_18] : memref<1x8x16xf32, #tpu.memory_space<vmem>>, vector<1x8x16xf32>
    %27 = vector.shape_cast %26 : vector<1x8x16xf32> to vector<8x16xf32>
    %28 = vector.shape_cast %25 : vector<8x16xf32> to vector<1x8x16xf32>
    tpu.vector_store %arg4[%c0_16, %c0_17, %c0_18], %28 {strides = array<i32>} : memref<1x8x16xf32, #tpu.memory_space<vmem>>, vector<1x8x16xf32>,
    return
  }
  func.func @transform_0(%arg0: i32) -> (i32, i32, i32) {
    %c0_i32 = arith.constant 0 : i32
    %c0_i32_0 = arith.constant 0 : i32
    %c0_i32_1 = arith.constant 0 : i32
    return %arg0, %c0_i32, %c0_i32_0 : i32, i32, i32
  }
  func.func @transform_1(%arg0: i32) -> (i32, i32) {
    %c0_i32 = arith.constant 0 : i32
    %c0_i32_0 = arith.constant 0 : i32
    %c0_i32_1 = arith.constant 0 : i32
    return %c0_i32, %c0_i32_0 : i32, i32
  }
  func.func @transform_2(%arg0: i32) -> (i32, i32) {
    %c0_i32 = arith.constant 0 : i32
    %c0_i32_0 = arith.constant 0 : i32
    %c0_i32_1 = arith.constant 0 : i32
    return %c0_i32, %c0_i32_0 : i32, i32
  }
  func.func @transform_3(%arg0: i32) -> (i32, i32, i32) {
    %c0_i32 = arith.constant 0 : i32
    %c0_i32_0 = arith.constant 0 : i32
    %c0_i32_1 = arith.constant 0 : i32
    return %arg0, %c0_i32, %c0_i32_0 : i32, i32, i32
  }
}

</mosaic_0001>

<llo_original>
// kernel: tpu_custom_call.1
$region0: #{tpu_custom_call.1}
  #allocation0 [shape = 'u32[]', space=smem, size = 0x4, offset = 0x4, fixed_abs, tag = 'smem constant byte address 0x4 - core index']
  #allocation1 [shape = 'u32[144,128]{1,0:T(1,128)}', space=vmem, size = 0x12000, scoped, tag = 'internal scratch']
  %s0 = inlined_call_operand.vmem [shape: f32[2,128,4], index: 0, kind: input, shape index: {}]
  %s1 = inlined_call_operand.vmem [shape: f32[40,256], index: 1, kind: input, shape index: {}]
  %s2 = inlined_call_operand.vmem [shape: f32[8,128], index: 2, kind: input, shape index: {}]
  %s3 = inlined_call_operand.hbm [shape: f32[2,8,16], index: 3, kind: output, shape index: {}]
  %s4 = sld [smem:[#allocation0]]
  $region45: #{tpu_custom_call.1} parent=0
    _
  %s6 = ssub.s32 1, %s4
  %s7 = scalar_select 0, %s6, %s4
  $region1: #{tpu_custom_call.1} parent=0
    #allocation2 [shape = 'u8[8192]{0}', space=vmem, size = 0x2000, scoped, tag = 'output window, operand 0']
    #allocation3 [shape = 's32[2]{0}', space=sflag, size = 0x8, scoped, tag = 'scoped memory for tpu_custom_call.1']
    %8 = vsyncpa [#allocation3], 0
    %s9 = scalar_lea.sflag [#allocation3], 1
    %10 = vsyncpa %s9, 0
    loop: start=0, step=1, limit=4
    $region2: #{tpu_custom_call.1} parent=1 // loop_pre_header
      _
    $region3: #{tpu_custom_call.1} parent=1 // loop_header
      %s12 = sphi 0, %s16
      %p13 = scmp.ge.s32.totalorder %s12, 4
      %s22 = sphi 0, %s24
      %s25 = sphi 0, %s22
      %s26 = sphi 0, %s25
      %s42 = sphi 0, %s26
      %s46 = sphi 0, %s46
      %s48 = sphi 0, %s46
      %s49 = sphi 0, %s48
      %s63 = sphi 0, %s49
      %s67 = sphi 0, %s67
      %s69 = sphi 0, %s67
      %s70 = sphi 0, %s69
      %s84 = sphi 0, %s70
      %s90 = sphi 0, %s92
      %s93 = sphi 0, %s90
      %s94 = sphi 0, %s93
      %s110 = sphi 0, %s94
    $region4: #{tpu_custom_call.1} parent=1 // loop_header_branch
      %15 = sbr.rel (%p13) target = $region8
    $region5: #{tpu_custom_call.1} parent=1 // loop_body
      %s17 = ssub.s32 %s12, 1
      %s18 = ssub.s32 %s12, 2
      %s19 = sadd.s32 %s12, 1
      %s20 = ssub.s32 %s12, %s19
      %p21 = scmp.eq.s32.totalorder %s20, 0
      %s23 = sadd.s32 %s22, 1
      %s24 = scalar_select %p21, %s22, %s23
      %p27 = pneg %p21
      %p28 = scmp.eq.s32.totalorder %s12, 1
      %p29 = por %p27, %p28
      %p30 = scmp.ne.s32.totalorder %s22, %s25
      %p31 = scmp.eq.s32.totalorder %s12, 0
      %p32 = por %p30, %p31
      %p33 = scmp.ne.s32.totalorder %s22, %s25
      %p34 = scmp.eq.s32.totalorder %s17, 1
      %p35 = por %p33, %p34
      %p36 = scmp.ne.s32.totalorder %s25, %s26
      %p37 = scmp.eq.s32.totalorder %s17, 0
      %p38 = por %p36, %p37
      %p39 = scmp.ne.s32.totalorder %s25, %s26
      %p40 = scmp.eq.s32.totalorder %s18, 1
      %p41 = por %p39, %p40
      %p43 = scmp.ne.s32.totalorder %s26, %s42
      %p44 = scmp.eq.s32.totalorder %s18, 0
      %p45 = por %p43, %p44
      %s47 = sadd.s32 %s46, 1
      %p50 = scmp.eq.s32.totalorder %s12, 1
      %p51 = scmp.ne.s32.totalorder %s46, %s48
      %p52 = scmp.eq.s32.totalorder %s12, 0
      %p53 = por %p51, %p52
      %p54 = scmp.ne.s32.totalorder %s46, %s48
      %p55 = scmp.eq.s32.totalorder %s17, 1
      %p56 = por %p54, %p55
      %p57 = scmp.ne.s32.totalorder %s48, %s49
      %p58 = scmp.eq.s32.totalorder %s17, 0
      %p59 = por %p57, %p58
      %p60 = scmp.ne.s32.totalorder %s48, %s49
      %p61 = scmp.eq.s32.totalorder %s18, 1
      %p62 = por %p60, %p61
      %p64 = scmp.ne.s32.totalorder %s49, %s63
      %p65 = scmp.eq.s32.totalorder %s18, 0
      %p66 = por %p64, %p65
      %s68 = sadd.s32 %s67, 1
      %p71 = scmp.eq.s32.totalorder %s12, 1
      %p72 = scmp.ne.s32.totalorder %s67, %s69
      %p73 = scmp.eq.s32.totalorder %s12, 0
      %p74 = por %p72, %p73
      %p75 = scmp.ne.s32.totalorder %s67, %s69
      %p76 = scmp.eq.s32.totalorder %s17, 1
      %p77 = por %p75, %p76
      %p78 = scmp.ne.s32.totalorder %s69, %s70
      %p79 = scmp.eq.s32.totalorder %s17, 0
      %p80 = por %p78, %p79
      %p81 = scmp.ne.s32.totalorder %s69, %s70
      %p82 = scmp.eq.s32.totalorder %s18, 1
      %p83 = por %p81, %p82
      %p85 = scmp.ne.s32.totalorder %s70, %s84
      %p86 = scmp.eq.s32.totalorder %s18, 0
      %p87 = por %p85, %p86
      %s88 = ssub.s32 %s12, %s19
      %p89 = scmp.eq.s32.totalorder %s88, 0
      %s91 = sadd.s32 %s90, 1
      %s92 = scalar_select %p89, %s90, %s91
      %p95 = pneg %p89
      %p96 = scmp.eq.s32.totalorder %s12, 1
      %p97 = por %p95, %p96
      %p98 = scmp.ne.s32.totalorder %s90, %s93
      %p99 = scmp.eq.s32.totalorder %s12, 0
      %p100 = por %p98, %p99
      %p101 = scmp.ne.s32.totalorder %s90, %s93
      %p102 = scmp.eq.s32.totalorder %s17, 1
      %p103 = por %p101, %p102
      %p104 = scmp.ne.s32.totalorder %s93, %s94
      %p105 = scmp.eq.s32.totalorder %s17, 0
      %p106 = por %p104, %p105
      %p107 = scmp.ne.s32.totalorder %s93, %s94
      %p108 = scmp.eq.s32.totalorder %s18, 1
      %p109 = por %p107, %p108
      %p111 = scmp.ne.s32.totalorder %s94, %s110
      %p112 = scmp.eq.s32.totalorder %s18, 0
      %p113 = por %p111, %p112
      %p114 = scmp.le.s32.totalorder 1, %s12
      %p115 = scmp.lt.s32.totalorder %s12, 3
      %p116 = pnand %p114, %p115
      %p117 = pneg %p116
      // Predicated region
      $region9: #{tpu_custom_call.1} parent=5 // pred_check
        _
      $region10: #{tpu_custom_call.1} parent=5 // pred_check_branch
        %119 = sbr.rel (%p116) target = $region12
      $region11: #{tpu_custom_call.1} parent=5 // pred_region
        %s120 = ssub.s32 %s12, 1
        // Predicated region
        $region13: #{tpu_custom_call.1} parent=11 // pred_check
          %p121 = pneg %p59
        $region14: #{tpu_custom_call.1} parent=11 // pred_check_branch
          %123 = sbr.rel (%p121) target = $region16
        $region15: #{tpu_custom_call.1} parent=11 // pred_region
          _
        $region16: #{tpu_custom_call.1} parent=11 // pred_fallthru
          _
        // Predicated region
        $region17: #{tpu_custom_call.1} parent=11 // pred_check
          %p124 = pneg %p80
        $region18: #{tpu_custom_call.1} parent=11 // pred_check_branch
          %126 = sbr.rel (%p124) target = $region20
        $region19: #{tpu_custom_call.1} parent=11 // pred_region
          _
        $region20: #{tpu_custom_call.1} parent=11 // pred_fallthru
          _
      $region12: #{tpu_custom_call.1} parent=5 // pred_fallthru
        _
      %p127 = scmp.lt.s32.totalorder %s12, 2
      // Predicated region
      $region21: #{tpu_custom_call.1} parent=5 // pred_check
        %p128 = pneg %p127
      $region22: #{tpu_custom_call.1} parent=5 // pred_check_branch
        %130 = sbr.rel (%p128) target = $region24
      $region23: #{tpu_custom_call.1} parent=5 // pred_region
        // Predicated region
        $region25: #{tpu_custom_call.1} parent=23 // pred_check
          %p131 = pneg %p32
        $region26: #{tpu_custom_call.1} parent=23 // pred_check_branch
          %133 = sbr.rel (%p131) target = $region28
        $region27: #{tpu_custom_call.1} parent=23 // pred_region
          %p134 = scmp.lt.s32.totalorder %s12, 1
          %s135 = scalar_select %p134, %s12, 1
          %s136 = smul.addr %s135, 16
          %s137 = smul.addr %s136, 8
          %s138 = scalar_lea.vmem %s0, %s137
        $region28: #{tpu_custom_call.1} parent=23 // pred_fallthru
          _
      $region24: #{tpu_custom_call.1} parent=5 // pred_fallthru
        _
      %p139 = scmp.le.s32.totalorder 1, %s12
      %p140 = scmp.lt.s32.totalorder %s12, 3
      %p141 = pnand %p139, %p140
      %p142 = pneg %p141
      // Predicated region
      $region29: #{tpu_custom_call.1} parent=5 // pred_check
        _
      $region30: #{tpu_custom_call.1} parent=5 // pred_check_branch
        %144 = sbr.rel (%p141) target = $region32
      $region31: #{tpu_custom_call.1} parent=5 // pred_region
        %s145 = ssub.s32 %s12, 1
        %p146 = scmp.lt.s32.totalorder %s17, 1
        %s147 = scalar_select %p146, %s17, 1
        %s148 = smul.addr %s147, 16
        %s149 = smul.addr %s148, 8
        %s150 = scalar_lea.vmem %s0, %s149
        %p151 = pneg %p38
        %p152 = pneg %p35
        %p153 = pneg %p59
        %p154 = pneg %p56
        %p155 = pneg %p80
        %p156 = pneg %p77
        %p157 = pneg %p106
        %p158 = pneg %p103
        %s159 = sand.u32 %s93, 1
        %s160 = scalar_lea.sflag [#allocation3], %s159
        %s161 = sand.u32 %s93, 1
        %s162 = smul.addr %s161, 8
        %s163 = scalar_lea.vmem [#allocation2], %s162
        %p164 = scmp.lt.s32.totalorder %s17, 1
        %s165 = scalar_select %p164, %s17, 1
        %s166 = smul.addr %s165, 16
        %s167 = smul.addr %s166, 8
        %s168 = scalar_lea.vmem %s0, %s167
        %v169 = vld [vmem:[%s168] sm:$0xff]
        %v170 = vld [vmem:[%s168 + $0x8] sm:$0xff]
        %v171 = vld [vmem:[%s168 + $0x10] sm:$0xff]
        %v172 = vld [vmem:[%s168 + $0x18] sm:$0xff]
        %v173 = vld [vmem:[%s168 + $0x20] sm:$0xff]
        %v174 = vld [vmem:[%s168 + $0x28] sm:$0xff]
        %v175 = vld [vmem:[%s168 + $0x30] sm:$0xff]
        %v176 = vld [vmem:[%s168 + $0x38] sm:$0xff]
        %v177 = vld [vmem:[%s168 + $0x40] sm:$0xff]
        %v178 = vld [vmem:[%s168 + $0x48] sm:$0xff]
        %v179 = vld [vmem:[%s168 + $0x50] sm:$0xff]
        %v180 = vld [vmem:[%s168 + $0x58] sm:$0xff]
        %v181 = vld [vmem:[%s168 + $0x60] sm:$0xff]
        %v182 = vld [vmem:[%s168 + $0x68] sm:$0xff]
        %v183 = vld [vmem:[%s168 + $0x70] sm:$0xff]
        %v184 = vld [vmem:[%s168 + $0x78] sm:$0xff]
        %v185 = vld [vmem:[%s1] sm:$0xf]
        %v186 = vld [vmem:[%s1 + $0x40] ss:$0 sm:$0xff]
        %vm187 = vcmask 31744
        %v189 = vsel %vm187, %v169, 0
        %v192 = vsel %vm187, %v170, 0
        %v195 = vsel %vm187, %v171, 0
        %v198 = vsel %vm187, %v172, 0
        %v201 = vsel %vm187, %v173, 0
        %v204 = vsel %vm187, %v174, 0
        %v207 = vsel %vm187, %v175, 0
        %v210 = vsel %vm187, %v176, 0
        %v213 = vsel %vm187, %v177, 0
        %v216 = vsel %vm187, %v178, 0
        %v219 = vsel %vm187, %v179, 0
        %v222 = vsel %vm187, %v180, 0
        %v225 = vsel %vm187, %v181, 0
        %v228 = vsel %vm187, %v182, 0
        %v231 = vsel %vm187, %v183, 0
        %v234 = vsel %vm187, %v184, 0
        %vm236 = vcmask 1043456
        %v238 = vsel %vm236, %v185, 0
        %240 = vmatprep.subr.mxu0 0.0
        %241 = vmatpush1.msra.mxu0 %v238
        %242 = vmatprep.subr.mxu0 0.0
        %243 = vmatpush1.msra.mxu0 0.0
        %244 = vmatprep.subr.mxu0 0.0
        %245 = vmatpush1.msra.mxu0 0.0
        %246 = vmatprep.subr.mxu0 0.0
        %247 = vmatpush1.msra.mxu0 0.0
        %248 = vmatprep.subr.mxu0 0.0
        %249 = vmatpush1.msra.mxu0 0.0
        %250 = vmatprep.subr.mxu0 0.0
        %251 = vmatpush1.msra.mxu0 0.0
        %252 = vmatprep.subr.mxu0 0.0
        %253 = vmatpush1.msra.mxu0 0.0
        %254 = vmatprep.subr.mxu0 0.0
        %255 = vmatpush1.msra.mxu0 0.0
        %256 = vmatprep.subr.mxu0 0.0
        %257 = vmatpush1.msra.mxu0 0.0
        %258 = vmatprep.subr.mxu0 0.0
        %259 = vmatpush1.msra.mxu0 0.0
        %260 = vmatprep.subr.mxu0 0.0
        %261 = vmatpush1.msra.mxu0 0.0
        %262 = vmatprep.subr.mxu0 0.0
        %263 = vmatpush1.msra.mxu0 0.0
        %264 = vmatprep.subr.mxu0 0.0
        %265 = vmatpush1.msra.mxu0 0.0
        %266 = vmatprep.subr.mxu0 0.0
        %267 = vmatpush1.msra.mxu0 0.0
        %268 = vmatprep.subr.mxu0 0.0
        %269 = vmatpush1.msra.mxu0 0.0
        %270 = vmatprep.subr.mxu0 0.0
        %271 = vmatpush1.msra.mxu0 0.0
        %272 = vmatprep.subr.mxu0 0.0
        %273 = vmatpush1.msra.mxu0 0.0
        %274 = vmatprep.subr.mxu0 0.0
        %275 = vmatpush1.msra.mxu0 0.0
        %276 = vmatprep.subr.mxu0 0.0
        %277 = vmatpush1.msra.mxu0 0.0
        %278 = vmatprep.subr.mxu0 0.0
        %279 = vmatpush1.msra.mxu0 0.0
        %280 = vmatprep.subr.mxu0 0.0
        %281 = vmatpush1.msra.mxu0 0.0
        %282 = vmatprep.subr.mxu0 0.0
        %283 = vmatpush1.msra.mxu0 0.0
        %284 = vmatprep.subr.mxu0 0.0
        %285 = vmatpush1.msra.mxu0 0.0
        %286 = vmatprep.subr.mxu0 0.0
        %287 = vmatpush1.msra.mxu0 0.0
        %288 = vmatprep.subr.mxu0 0.0
        %289 = vmatpush1.msra.mxu0 0.0
        %290 = vmatprep.subr.mxu0 0.0
        %291 = vmatpush1.msra.mxu0 0.0
        %292 = vmatprep.subr.mxu0 0.0
        %293 = vmatpush1.msra.mxu0 0.0
        %294 = vmatprep.subr.mxu0 0.0
        %295 = vmatpush1.msra.mxu0 0.0
        %296 = vmatprep.subr.mxu0 0.0
        %297 = vmatpush1.msra.mxu0 0.0
        %298 = vmatprep.subr.mxu0 0.0
        %299 = vmatpush1.msra.mxu0 0.0
        %300 = vmatprep.subr.mxu0 0.0
        %301 = vmatpush1.msra.mxu0 0.0
        %302 = vmatprep.subr.mxu0 0.0
        %303 = vmatpush1.msra.mxu0 0.0
        %304 = vmatprep.mubr.f32.mxu0 0.0
        %305 = vmatmul.mubr.f32.gmra.mrb[0].mxu0 %v189
        %v306 = vpop.f32.mrb[0].mxu0
        %v307 = vadd.f32 %v186, %v306
        %v308 = vpop.f32.mrb[0].mxu0
        %309 = vmatprep.mubr.f32.mxu0 0.0
        %310 = vmatmul.mubr.f32.gmra.mrb[0].mxu0 %v192
        %v311 = vpop.f32.mrb[0].mxu0
        %v312 = vadd.f32 %v186, %v311
        %v313 = vpop.f32.mrb[0].mxu0
        %314 = vmatprep.mubr.f32.mxu0 0.0
        %315 = vmatmul.mubr.f32.gmra.mrb[0].mxu0 %v195
        %v316 = vpop.f32.mrb[0].mxu0
        %v317 = vadd.f32 %v186, %v316
        %v318 = vpop.f32.mrb[0].mxu0
        %319 = vmatprep.mubr.f32.mxu0 0.0
        %320 = vmatmul.mubr.f32.gmra.mrb[0].mxu0 %v198
        %v321 = vpop.f32.mrb[0].mxu0
        %v322 = vadd.f32 %v186, %v321
        %v323 = vpop.f32.mrb[0].mxu0
        %324 = vmatprep.mubr.f32.mxu0 0.0
        %325 = vmatmul.mubr.f32.gmra.mrb[0].mxu0 %v201
        %v326 = vpop.f32.mrb[0].mxu0
        %v327 = vadd.f32 %v186, %v326
        %v328 = vpop.f32.mrb[0].mxu0
        %329 = vmatprep.mubr.f32.mxu0 0.0
        %330 = vmatmul.mubr.f32.gmra.mrb[0].mxu0 %v204
        %v331 = vpop.f32.mrb[0].mxu0
        %v332 = vadd.f32 %v186, %v331
        %v333 = vpop.f32.mrb[0].mxu0
        %334 = vmatprep.mubr.f32.mxu0 0.0
        %335 = vmatmul.mubr.f32.gmra.mrb[0].mxu0 %v207
        %v336 = vpop.f32.mrb[0].mxu0
        %v337 = vadd.f32 %v186, %v336
        %v338 = vpop.f32.mrb[0].mxu0
        %339 = vmatprep.mubr.f32.mxu0 0.0
        %340 = vmatmul.mubr.f32.gmra.mrb[0].mxu0 %v210
        %v341 = vpop.f32.mrb[0].mxu0
        %v342 = vadd.f32 %v186, %v341
        %v343 = vpop.f32.mrb[0].mxu0
        %344 = vmatprep.mubr.f32.mxu0 0.0
        %345 = vmatmul.mubr.f32.gmra.mrb[0].mxu0 %v213
        %v346 = vpop.f32.mrb[0].mxu0
        %v347 = vadd.f32 %v186, %v346
        %v348 = vpop.f32.mrb[0].mxu0
        %349 = vmatprep.mubr.f32.mxu0 0.0
        %350 = vmatmul.mubr.f32.gmra.mrb[0].mxu0 %v216
        %v351 = vpop.f32.mrb[0].mxu0
        %v352 = vadd.f32 %v186, %v351
        %v353 = vpop.f32.mrb[0].mxu0
        %354 = vmatprep.mubr.f32.mxu0 0.0
        %355 = vmatmul.mubr.f32.gmra.mrb[0].mxu0 %v219
        %v356 = vpop.f32.mrb[0].mxu0
        %v357 = vadd.f32 %v186, %v356
        %v358 = vpop.f32.mrb[0].mxu0
        %359 = vmatprep.mubr.f32.mxu0 0.0
        %360 = vmatmul.mubr.f32.gmra.mrb[0].mxu0 %v222
        %v361 = vpop.f32.mrb[0].mxu0
        %v362 = vadd.f32 %v186, %v361
        %v363 = vpop.f32.mrb[0].mxu0
        %364 = vmatprep.mubr.f32.mxu0 0.0
        %365 = vmatmul.mubr.f32.gmra.mrb[0].mxu0 %v225
        %v366 = vpop.f32.mrb[0].mxu0
        %v367 = vadd.f32 %v186, %v366
        %v368 = vpop.f32.mrb[0].mxu0
        %369 = vmatprep.mubr.f32.mxu0 0.0
        %370 = vmatmul.mubr.f32.gmra.mrb[0].mxu0 %v228
        %v371 = vpop.f32.mrb[0].mxu0
        %v372 = vadd.f32 %v186, %v371
        %v373 = vpop.f32.mrb[0].mxu0
        %374 = vmatprep.mubr.f32.mxu0 0.0
        %375 = vmatmul.mubr.f32.gmra.mrb[0].mxu0 %v231
        %v376 = vpop.f32.mrb[0].mxu0
        %v377 = vadd.f32 %v186, %v376
        %v378 = vpop.f32.mrb[0].mxu0
        %379 = vmatprep.mubr.f32.mxu0 0.0
        %380 = vmatmul.mubr.f32.gmra.mrb[0].mxu0 %v234
        %v381 = vpop.f32.mrb[0].mxu0
        %v382 = vadd.f32 %v186, %v381
        %v383 = vpop.f32.mrb[0].mxu0
        %384 = vdwg.mxu0
        %v385 = vmax.f32 %v307, 0.0
        %v386 = vmax.f32 %v312, 0.0
        %v387 = vmax.f32 %v317, 0.0
        %v388 = vmax.f32 %v322, 0.0
        %v389 = vmax.f32 %v327, 0.0
        %v390 = vmax.f32 %v332, 0.0
        %v391 = vmax.f32 %v337, 0.0
        %v392 = vmax.f32 %v342, 0.0
        %v393 = vmax.f32 %v347, 0.0
        %v394 = vmax.f32 %v352, 0.0
        %v395 = vmax.f32 %v357, 0.0
        %v396 = vmax.f32 %v362, 0.0
        %v397 = vmax.f32 %v367, 0.0
        %v398 = vmax.f32 %v372, 0.0
        %v399 = vmax.f32 %v377, 0.0
        %v400 = vmax.f32 %v382, 0.0
        %v401 = vld [vmem:[%s2] sm:$0xff]
        %402 = vmatprep.subr.mxu0 0.0
        %403 = vmatpush1.msra.mxu0 %v385
        %404 = vmatprep.subr.mxu0 0.0
        %405 = vmatpush1.msra.mxu0 %v386
        %406 = vmatprep.subr.mxu0 0.0
        %407 = vmatpush1.msra.mxu0 %v387
        %408 = vmatprep.subr.mxu0 0.0
        %409 = vmatpush1.msra.mxu0 %v388
        %410 = vmatprep.subr.mxu0 0.0
        %411 = vmatpush1.msra.mxu0 %v389
        %412 = vmatprep.subr.mxu0 0.0
        %413 = vmatpush1.msra.mxu0 %v390
        %414 = vmatprep.subr.mxu0 0.0
        %415 = vmatpush1.msra.mxu0 %v391
        %416 = vmatprep.subr.mxu0 0.0
        %417 = vmatpush1.msra.mxu0 %v392
        %418 = vmatprep.subr.mxu0 0.0
        %419 = vmatpush1.msra.mxu0 %v393
        %420 = vmatprep.subr.mxu0 0.0
        %421 = vmatpush1.msra.mxu0 %v394
        %422 = vmatprep.subr.mxu0 0.0
        %423 = vmatpush1.msra.mxu0 %v395
        %424 = vmatprep.subr.mxu0 0.0
        %425 = vmatpush1.msra.mxu0 %v396
        %426 = vmatprep.subr.mxu0 0.0
        %427 = vmatpush1.msra.mxu0 %v397
        %428 = vmatprep.subr.mxu0 0.0
        %429 = vmatpush1.msra.mxu0 %v398
        %430 = vmatprep.subr.mxu0 0.0
        %431 = vmatpush1.msra.mxu0 %v399
        %432 = vmatprep.subr.mxu0 0.0
        %433 = vmatpush1.msra.mxu0 %v400
        %434 = vmatprep.subr.mxu0 0.0
        %435 = vmatpush1.msra.mxu0 0.0
        %436 = vmatprep.subr.mxu0 0.0
        %437 = vmatpush1.msra.mxu0 0.0
        %438 = vmatprep.subr.mxu0 0.0
        %439 = vmatpush1.msra.mxu0 0.0
        %440 = vmatprep.subr.mxu0 0.0
        %441 = vmatpush1.msra.mxu0 0.0
        %442 = vmatprep.subr.mxu0 0.0
        %443 = vmatpush1.msra.mxu0 0.0
        %444 = vmatprep.subr.mxu0 0.0
        %445 = vmatpush1.msra.mxu0 0.0
        %446 = vmatprep.subr.mxu0 0.0
        %447 = vmatpush1.msra.mxu0 0.0
        %448 = vmatprep.subr.mxu0 0.0
        %449 = vmatpush1.msra.mxu0 0.0
        %450 = vmatprep.subr.mxu0 0.0
        %451 = vmatpush1.msra.mxu0 0.0
        %452 = vmatprep.subr.mxu0 0.0
        %453 = vmatpush1.msra.mxu0 0.0
        %454 = vmatprep.subr.mxu0 0.0
        %455 = vmatpush1.msra.mxu0 0.0
        %456 = vmatprep.subr.mxu0 0.0
        %457 = vmatpush1.msra.mxu0 0.0
        %458 = vmatprep.subr.mxu0 0.0
        %459 = vmatpush1.msra.mxu0 0.0
        %460 = vmatprep.subr.mxu0 0.0
        %461 = vmatpush1.msra.mxu0 0.0
        %462 = vmatprep.subr.mxu0 0.0
        %463 = vmatpush1.msra.mxu0 0.0
        %464 = vmatprep.subr.mxu0 0.0
        %465 = vmatpush1.msra.mxu0 0.0
        %466 = vmatprep.mubr.f32.mxu0 0.0
        %467 = vmatmul.mubr.f32.gmra.mrb[0].mxu0 %v401
        %v468 = vpop.f32.mrb[0].mxu0
        %v469 = vadd.f32 0.0, %v468
        %v470 = vpop.f32.mrb[0].mxu0
        %471 = vdwg.mxu0
        %v472 = vld [vmem:[%s1 + $0x8] sm:$0xff]
        %v473 = vld [vmem:[%s1 + $0x18] sm:$0xff]
        %v474 = vld [vmem:[%s1 + $0x28] sm:$0xff]
        %v475 = vld [vmem:[%s1 + $0x38] sm:$0xff]
        %v476 = vld [vmem:[%s1 + $0x48] ss:$0 sm:$0xff]
        %vm477 = vcmask 261120
        %v479 = vsel %vm477, %v469, 0
        %481 = vmatprep.subr.mxu0 0.0
        %482 = vmatpush1.msra.mxu0 %v472
        %483 = vmatprep.subr.mxu0 0.0
        %484 = vmatpush1.msra.mxu0 %v473
        %485 = vmatprep.subr.mxu0 0.0
        %486 = vmatpush1.msra.mxu0 %v474
        %487 = vmatprep.subr.mxu0 0.0
        %488 = vmatpush1.msra.mxu0 %v475
        %489 = vmatprep.subr.mxu0 0.0
        %490 = vmatpush1.msra.mxu0 0.0
        %491 = vmatprep.subr.mxu0 0.0
        %492 = vmatpush1.msra.mxu0 0.0
        %493 = vmatprep.subr.mxu0 0.0
        %494 = vmatpush1.msra.mxu0 0.0
        %495 = vmatprep.subr.mxu0 0.0
        %496 = vmatpush1.msra.mxu0 0.0
        %497 = vmatprep.subr.mxu0 0.0
        %498 = vmatpush1.msra.mxu0 0.0
        %499 = vmatprep.subr.mxu0 0.0
        %500 = vmatpush1.msra.mxu0 0.0
        %501 = vmatprep.subr.mxu0 0.0
        %502 = vmatpush1.msra.mxu0 0.0
        %503 = vmatprep.subr.mxu0 0.0
        %504 = vmatpush1.msra.mxu0 0.0
        %505 = vmatprep.subr.mxu0 0.0
        %506 = vmatpush1.msra.mxu0 0.0
        %507 = vmatprep.subr.mxu0 0.0
        %508 = vmatpush1.msra.mxu0 0.0
        %509 = vmatprep.subr.mxu0 0.0
        %510 = vmatpush1.msra.mxu0 0.0
        %511 = vmatprep.subr.mxu0 0.0
        %512 = vmatpush1.msra.mxu0 0.0
        %513 = vmatprep.subr.mxu0 0.0
        %514 = vmatpush1.msra.mxu0 0.0
        %515 = vmatprep.subr.mxu0 0.0
        %516 = vmatpush1.msra.mxu0 0.0
        %517 = vmatprep.subr.mxu0 0.0
        %518 = vmatpush1.msra.mxu0 0.0
        %519 = vmatprep.subr.mxu0 0.0
        %520 = vmatpush1.msra.mxu0 0.0
        %521 = vmatprep.subr.mxu0 0.0
        %522 = vmatpush1.msra.mxu0 0.0
        %523 = vmatprep.subr.mxu0 0.0
        %524 = vmatpush1.msra.mxu0 0.0
        %525 = vmatprep.subr.mxu0 0.0
        %526 = vmatpush1.msra.mxu0 0.0
        %527 = vmatprep.subr.mxu0 0.0
        %528 = vmatpush1.msra.mxu0 0.0
        %529 = vmatprep.subr.mxu0 0.0
        %530 = vmatpush1.msra.mxu0 0.0
        %531 = vmatprep.subr.mxu0 0.0
        %532 = vmatpush1.msra.mxu0 0.0
        %533 = vmatprep.subr.mxu0 0.0
        %534 = vmatpush1.msra.mxu0 0.0
        %535 = vmatprep.subr.mxu0 0.0
        %536 = vmatpush1.msra.mxu0 0.0
        %537 = vmatprep.subr.mxu0 0.0
        %538 = vmatpush1.msra.mxu0 0.0
        %539 = vmatprep.subr.mxu0 0.0
        %540 = vmatpush1.msra.mxu0 0.0
        %541 = vmatprep.subr.mxu0 0.0
        %542 = vmatpush1.msra.mxu0 0.0
        %543 = vmatprep.subr.mxu0 0.0
        %544 = vmatpush1.msra.mxu0 0.0
        %545 = vmatprep.mubr.f32.mxu0 0.0
        %546 = vmatmul.mubr.f32.gmra.mrb[0].mxu0 %v479
        %v547 = vpop.f32.mrb[0].mxu0
        %v548 = vadd.f32 %v476, %v547
        %v549 = vpop.f32.mrb[0].mxu0
        %550 = vdwg.mxu0
        %v551 = vmul.f32 %v548, %v548
        %vm552 = vcmask 130048
        %v553 = vsel %vm552, %v551, 0.0
        %554 = vadd.xlane.f32.xlu0 %v553
        %v555 = vpop.xlane.xlu0 %554
        %v556 = vrot.slane %v555, 4
        %v557 = vadd.f32 %v555, %v556
        %v558 = vrot.slane %v557, 2
        %v559 = vadd.f32 %v557, %v558
        %v560 = vrot.slane %v559, 1
        %v561 = vadd.f32 %v559, %v560
        %v562 = vrsqrt.pop %v561
        %v563 = vmul.f32 %v561, %v562
        %vm564 = vcmp.eq.f32.partialorder %v561, inf
        %v565 = vsel %vm564, %v561, %v563
        %vm566 = vcmp.eq.f32.partialorder %v561, 0.0
        %v567 = vand.u32 %v561, 2147483648
        %v568 = vsel %vm566, %v567, %v565
        %v569 = vmax.f32 %v568, 1e-12
        %v570 = vrcp.pop %v569
        %v571 = vmul.f32 %v548, %v570
        %572 = vst.msk [vmem:[%s163] sm:$0xff] %vm552, %v571
        %s573 = sand.u32 %s93, 1
        %s574 = scalar_lea.sflag [#allocation3], %s573
        %s575 = sand.u32 %s93, 1
        %s576 = smul.addr %s575, 8
        %s577 = scalar_lea.vmem [#allocation2], %s576
        // Predicated region
        $region33: #{tpu_custom_call.1} parent=31 // pred_check
          %p578 = pneg %p103
        $region34: #{tpu_custom_call.1} parent=31 // pred_check_branch
          %580 = sbr.rel (%p578) target = $region36
        $region35: #{tpu_custom_call.1} parent=31 // pred_region
          %s582 = ssub.s32 128, 128
          %583 = vsyncadd %s574, %s582
          %s584 = smul.addr %s17, 128
          %s585 = scalar_lea.hbm %s3, %s584
          %s587 = sshll.u32 %s577, 4
          %s588 = int_to_ptr.vmem [resolvable:$true] %s587
          %590 = dma.vmem_to_hbm [thread:$0]  %s588, 128, %s585, %s574
        $region36: #{tpu_custom_call.1} parent=31 // pred_fallthru
          _
      $region32: #{tpu_custom_call.1} parent=5 // pred_fallthru
        _
      %p591 = scmp.le.s32.totalorder 2, %s12
      // Predicated region
      $region37: #{tpu_custom_call.1} parent=5 // pred_check
        %p592 = pneg %p591
      $region38: #{tpu_custom_call.1} parent=5 // pred_check_branch
        %594 = sbr.rel (%p592) target = $region40
      $region39: #{tpu_custom_call.1} parent=5 // pred_region
        %s595 = ssub.s32 %s12, 2
        // Predicated region
        $region41: #{tpu_custom_call.1} parent=39 // pred_check
          %p596 = pneg %p109
        $region42: #{tpu_custom_call.1} parent=39 // pred_check_branch
          %598 = sbr.rel (%p596) target = $region44
        $region43: #{tpu_custom_call.1} parent=39 // pred_region
          %s599 = sand.u32 %s94, 1
          %s600 = scalar_lea.sflag [#allocation3], %s599
          %s601 = sand.u32 %s94, 1
          %s602 = smul.addr %s601, 8
          %s603 = scalar_lea.vmem [#allocation2], %s602
          %604 = dma.done %s600, 128
        $region44: #{tpu_custom_call.1} parent=39 // pred_fallthru
          _
      $region40: #{tpu_custom_call.1} parent=5 // pred_fallthru
        _
    $region6: #{tpu_custom_call.1} parent=1 // loop_footer
      %s16 = sadd.s32 1, %s12
    $region7: #{tpu_custom_call.1} parent=1 // loop_footer_branch
      %11 = sbr.rel target = $region3
    $region8: #{tpu_custom_call.1} parent=1 // loop_exit
      _
    %605 = vsyncpa [#allocation3], 1
    %s606 = scalar_lea.sflag [#allocation3], 1
    %607 = vsyncpa %s606, 1

</llo_original>
